<compile_context>
chip_gen: v7x
topology: tpu7x:2x2x1
jax: 0.10.0
libtpu: 0.0.40
codegen_flags: <defaults>
</compile_context>

<pallas_src>
import functools

import jax
import jax.numpy as jnp
from jax.experimental import pallas as pl
from jax.experimental.pallas import tpu as pltpu


def _round_up(x: int, m: int) -> int:
    return ((x + m - 1) // m) * m


def _cdiv(a: int, b: int) -> int:
    return -(-a // b)


def _pad_cast(x, shape, dtype):
    """Cast to dtype and zero-pad to `shape`; no-op copies are skipped."""
    x = x.astype(dtype)
    if x.shape == tuple(shape):
        return x
    buf = jnp.zeros(shape, dtype)
    return buf.at[tuple(slice(0, s) for s in x.shape)].set(x)


# --------------------------------------------------------------------------- #
# Pass 1: column sums of chi_tau  ->  u = relu(u_kernel) / <chi_mean, relu(uk)>
# --------------------------------------------------------------------------- #
def _u_pass_kernel(chi_tau_ref, uk_ref, u_ref, colsum_ref, *, inv_n):
    i = pl.program_id(0)

    @pl.when(i == 0)
    def _init():
        colsum_ref[...] = jnp.zeros_like(colsum_ref)

    colsum_ref[...] += jnp.sum(chi_tau_ref[...], axis=0, keepdims=True)

    @pl.when(i == pl.num_programs(0) - 1)
    def _finalize():
        chi_mean = colsum_ref[...] * inv_n                       # (1, Mp)
        ac_u = jnp.maximum(uk_ref[...], 0.0)                     # ReLU activation
        denom = jnp.sum(chi_mean * ac_u, axis=1, keepdims=True)  # (1, 1)
        u_ref[...] = ac_u / denom


# --------------------------------------------------------------------------- #
# Pass 2: batch-tiled grams / sigma / v / mu, accumulated in the output blocks.
# Grid = (cores, batch_tiles_per_core); axis 0 is "parallel" (v7x megacore),
# axis 1 is the "arbitrary" reduction over batch tiles.
# --------------------------------------------------------------------------- #
def _vampu_main_kernel(u_ref, chi_t_ref, chi_tau_ref,
                       mu_ref, v_ref, c00_ref, c11_ref, c01_ref, sigma_ref,
                       *, inv_n, gram_dtype):
    i = pl.program_id(1)

    @pl.when(i == 0)
    def _init():
        v_ref[...] = jnp.zeros_like(v_ref)
        c00_ref[...] = jnp.zeros_like(c00_ref)
        c11_ref[...] = jnp.zeros_like(c11_ref)
        c01_ref[...] = jnp.zeros_like(c01_ref)
        sigma_ref[...] = jnp.zeros_like(sigma_ref)

    u = u_ref[...]                      # (1, Mp)   f32
    chi_tau = chi_tau_ref[...]          # (tn, Mp)  f32
    ct = chi_t_ref[...]                 # (tn, Mp)  gram_dtype (pre-cast in wrapper)

    # Per-row dot <chi_tau[r,:], u> on the VPU (mul) + XLU (lane reduce): keeps
    # the 1-wide matvec off the MXU, which is saturated by the 4 gram matmuls.
    chi_tau_u = jnp.sum(chi_tau * u, axis=1, keepdims=True)      # (tn, 1) f32
    gamma = chi_tau * chi_tau_u                                  # (tn, Mp) f32

    # mu rows for this batch tile (no reduction, written once).
    mu_ref[...] = inv_n * chi_tau_u

    # v = norm * column sums of gamma  (== corr_tau @ u^T, corr_tau eliminated)
    v_ref[...] += jnp.sum(gamma, axis=0, keepdims=True)

    g = gamma.astype(gram_dtype)
    ctau = chi_tau.astype(gram_dtype)

    # Transposed-LHS contraction (batch axis); lowered directly to the MXU.
    # (Review item: verify in the Mosaic dump that no vxpose is inserted.)
    def dot_tn(a, b):                   # a^T @ b
        return jax.lax.dot_general(a, b, (((0,), (0,)), ((), ())),
                                   preferred_element_type=jnp.float32)

    c00_ref[...] += dot_tn(ct, ct)
    c11_ref[...] += dot_tn(g, g)
    c01_ref[...] += dot_tn(ct, g)
    sigma_ref[...] += dot_tn(g, ctau)

    @pl.when(i == pl.num_programs(1) - 1)
    def _finalize():
        v_ref[...] *= inv_n
        c00_ref[...] *= inv_n
        c11_ref[...] *= inv_n
        c01_ref[...] *= inv_n
        sigma_ref[...] *= inv_n


# --------------------------------------------------------------------------- #
# Wrapper
# --------------------------------------------------------------------------- #
def vampu_forward(chi_t, chi_tau, u_kernel, *, gram_dtype=jnp.bfloat16,
                  max_tile_n=1024, core_split=None,
                  vmem_budget_bytes=48 << 20):
    """Returns [u, v, C00, C11, C01, sigma, mu] with torch-matching shapes."""
    n_batch, M = chi_t.shape
    inv_n = 1.0 / n_batch
    f32 = jnp.float32
    gb = jnp.dtype(gram_dtype).itemsize

    Mp = _round_up(M, 128)

    # ---- batch tile: biggest that fits the VMEM budget ----------------------
    # Worst case: the 4 (Mp,Mp) f32 accumulators (+ v) double-buffered by the
    # pipeline, plus double-buffered chi_t/chi_tau input tiles and mu blocks.
    acc_bytes = 2 * (4 * Mp * Mp * 4 + Mp * 4)
    per_row = 2 * Mp * (gb + 4) + 2 * 4
    tn = int(min(max_tile_n, max((vmem_budget_bytes - acc_bytes) // per_row, 8)))
    Np0 = _round_up(n_batch, 8)
    if tn >= Np0:
        tn = Np0
    else:
        tn = max((tn // 128) * 128, 8)        # MXU-friendly contraction tile

    nt0 = _cdiv(Np0, tn)
    if core_split is None:
        core_split = 2 if nt0 >= 2 else 1     # v7x: use both TensorCores
    cores = max(1, min(core_split, nt0))
    npc = _cdiv(nt0, cores)                   # batch tiles per core
    Np = tn * cores * npc

    # Zero padding is exactly neutral for every output (ReLU(0)=0, zero rows /
    # columns contribute nothing).  Copies are skipped when already aligned.
    chi_t_p = _pad_cast(chi_t, (Np, Mp), gram_dtype)   # only feeds the grams
    chi_tau_p = _pad_cast(chi_tau, (Np, Mp), f32)
    uk_p = _pad_cast(u_kernel.reshape(1, M), (1, Mp), f32)

    # ----- pass 1: u ---------------------------------------------------------
    pass1_need = 2 * tn * Mp * 4 + 4 * Mp * 4
    u_p = pl.pallas_call(
        functools.partial(_u_pass_kernel, inv_n=inv_n),
        out_shape=jax.ShapeDtypeStruct((1, Mp), f32),
        grid=(cores * npc,),
        in_specs=[pl.BlockSpec((tn, Mp), lambda i: (i, 0)),
                  pl.BlockSpec((1, Mp), lambda i: (0, 0))],
        out_specs=pl.BlockSpec((1, Mp), lambda i: (0, 0)),
        scratch_shapes=[pltpu.VMEM((1, Mp), f32)],
        compiler_params=pltpu.CompilerParams(
            dimension_semantics=("arbitrary",),
            vmem_limit_bytes=int(min(128 << 20, max(32 << 20, 2 * pass1_need)))),
    )(chi_tau_p, uk_p)

    # ----- pass 2: grams / sigma / v / mu ------------------------------------
    out_shapes = (
        jax.ShapeDtypeStruct((Np, 1), f32),            # mu
        jax.ShapeDtypeStruct((cores, 1, Mp), f32),     # v partials
        jax.ShapeDtypeStruct((cores, Mp, Mp), f32),    # C00 partials
        jax.ShapeDtypeStruct((cores, Mp, Mp), f32),    # C11 partials
        jax.ShapeDtypeStruct((cores, Mp, Mp), f32),    # C01 partials
        jax.ShapeDtypeStruct((cores, Mp, Mp), f32),    # sigma partials
    )
    gram_spec = pl.BlockSpec((None, Mp, Mp), lambda c, i: (c, 0, 0))
    out_specs = (
        pl.BlockSpec((tn, 1), lambda c, i: (c * npc + i, 0)),
        pl.BlockSpec((None, 1, Mp), lambda c, i: (c, 0, 0)),
        gram_spec, gram_spec, gram_spec, gram_spec,
    )

    pass2_need = acc_bytes + tn * per_row + 8 * Mp * 4
    mu_p, v_p, c00_p, c11_p, c01_p, sigma_p = pl.pallas_call(
        functools.partial(_vampu_main_kernel, inv_n=inv_n, gram_dtype=gram_dtype),
        out_shape=out_shapes,
        grid=(cores, npc),
        in_specs=[pl.BlockSpec((1, Mp), lambda c, i: (0, 0)),
                  pl.BlockSpec((tn, Mp), lambda c, i: (c * npc + i, 0)),
                  pl.BlockSpec((tn, Mp), lambda c, i: (c * npc + i, 0))],
        out_specs=out_specs,
        compiler_params=pltpu.CompilerParams(
            dimension_semantics=("parallel", "arbitrary"),
            vmem_limit_bytes=int(min(128 << 20,
                                     max(32 << 20, pass2_need + (8 << 20))))),
    )(u_p, chi_t_p, chi_tau_p)

    # ----- glue: cross-core partial sums, strip padding, torch shapes --------
    u = u_p[:, :M]                                            # (1, M)
    v = jnp.sum(v_p[:, 0, :M], axis=0).reshape(M, 1)          # (M, 1)
    mu = mu_p[:n_batch, :]                                    # (N, 1)
    c00 = jnp.sum(c00_p, axis=0)[:M, :M]
    c11 = jnp.sum(c11_p, axis=0)[:M, :M]
    c01 = jnp.sum(c01_p, axis=0)[:M, :M]
    sigma = jnp.sum(sigma_p, axis=0)[:M, :M]

    def tile(a):  # torch `_tile`: broadcast view, no materialized copies
        return jnp.broadcast_to(a[None, ...], (n_batch,) + a.shape)

    return [tile(t) for t in (u, v, c00, c11, c01, sigma)] + [mu]


# --------------------------------------------------------------------------- #
# Pure-JAX reference mirroring the torch forward (for verification)
# --------------------------------------------------------------------------- #
def _vampu_reference(chi_t, chi_tau, u_kernel):
    with jax.default_matmul_precision("highest"):
        n_batch = chi_t.shape[0]
        norm = 1.0 / n_batch
        corr_tau = norm * (chi_tau.T @ chi_tau)
        chi_mean = jnp.mean(chi_tau, axis=0, keepdims=True)
        ac_u = jnp.maximum(u_kernel, 0.0)
        kernel_u = ac_u[None, :]
        u = kernel_u / jnp.sum(chi_mean * kernel_u, axis=1, keepdims=True)
        u_t = u.T
        v = corr_tau @ u_t
        mu = norm * (chi_tau @ u_t)
        sigma = (chi_tau * mu).T @ chi_tau
        gamma = chi_tau * (chi_tau @ u_t)
        c00 = norm * (chi_t.T @ chi_t)
        c11 = norm * (gamma.T @ gamma)
        c01 = norm * (chi_t.T @ gamma)
        tile = lambda a: jnp.broadcast_to(a[None, ...], (n_batch,) + a.shape)
        return [tile(t) for t in (u, v, c00, c11, c01, sigma)] + [mu]


def _check(outs, refs, atol, rtol):
    for o, r in zip(outs, refs):
        assert o.shape == r.shape, (o.shape, r.shape)
        assert jnp.allclose(o, r, atol=atol, rtol=rtol), (
            float(jnp.max(jnp.abs(o - r))), o.shape)


if __name__ == "__main__":
    key = jax.random.PRNGKey(0)

    def make_inputs(key, N, M):
        k1, k2 = jax.random.split(key)
        chi_t = jax.nn.softmax(jax.random.normal(k1, (N, M), jnp.float32), axis=-1)
        chi_tau = jax.nn.softmax(jax.random.normal(k2, (N, M), jnp.float32), axis=-1)
        u_kernel = (1.0 / M) * jnp.ones((M,), jnp.float32)   # torch __init__ init
        return chi_t, chi_tau, u_kernel

    ka, kb, kc = jax.random.split(key, 3)

    # Config A: N=8, M=32 (small, lane-padded to 128)
    chi_t, chi_tau, u_kernel = make_inputs(ka, 8, 32)
    refs = _vampu_reference(chi_t, chi_tau, u_kernel)

    # f32 grams: tight check
    outs = jax.block_until_ready(
        vampu_forward(chi_t, chi_tau, u_kernel, gram_dtype=jnp.float32))
    _check(outs, refs, atol=1e-5, rtol=1e-4)

    # bf16 grams (default, MXU-native): looser check
    outs = jax.block_until_ready(vampu_forward(chi_t, chi_tau, u_kernel))
    _check(outs, refs, atol=1e-4, rtol=3e-2)

    # Config B: unaligned N=10, M=12 to exercise the zero-padding path
    chi_t2, chi_tau2, u_kernel2 = make_inputs(kb, 10, 12)
    refs2 = _vampu_reference(chi_t2, chi_tau2, u_kernel2)
    outs2 = jax.block_until_ready(
        vampu_forward(chi_t2, chi_tau2, u_kernel2, gram_dtype=jnp.float32))
    _check(outs2, refs2, atol=1e-5, rtol=1e-4)

    # Config C: N=600, M=48 with a forced 128-row tile to exercise multi-tile
    # accumulation + the 2-way core split (parallel grid axis) path.
    chi_t3, chi_tau3, u_kernel3 = make_inputs(kc, 600, 48)
    refs3 = _vampu_reference(chi_t3, chi_tau3, u_kernel3)
    outs3 = jax.block_until_ready(
        vampu_forward(chi_t3, chi_tau3, u_kernel3,
                      gram_dtype=jnp.float32, max_tile_n=128))
    _check(outs3, refs3, atol=2e-5, rtol=1e-3)

    print("KERNEL_OK")
</pallas_src>

<mosaic_0001>
module attributes {stable_mosaic.version = 11 : i64} {
  func.func @_u_pass_kernel(%arg0: i32, %arg1: memref<8x128xf32, #tpu.memory_space<vmem>>, %arg2: memref<1x128xf32, #tpu.memory_space<vmem>>, %arg3: memref<1x128xf32, #tpu.memory_space<vmem>>, %arg4: memref<1x128xf32, #tpu.memory_space<vmem>>) attributes {dimension_semantics = [#tpu.dimension_semantics<arbitrary>], iteration_bounds = array<i64: 1>, scalar_prefetch = 0 : i64, scratch_operands = 1 : i64, tpu.core_type = #tpu.core_type<tc>, window_params = [{transform_indices = @transform_0, window_bounds = array<i64: 8, 128>}, {pipeline_mode = #tpu.pipeline_mode<synchronous>, transform_indices = @transform_1, window_bounds = array<i64: 1, 128>}, {pipeline_mode = #tpu.pipeline_mode<synchronous>, transform_indices = @transform_2, window_bounds = array<i64: 1, 128>}]} {
    %c0_i32 = arith.constant 0 : i32
    %0 = arith.cmpi eq, %arg0, %c0_i32 : i32
    %1 = arith.extui %0 : i1 to i32
    %c0_i32_0 = arith.constant 0 : i32
    %2 = arith.cmpi ne, %1, %c0_i32_0 : i32
    scf.if %2 {
      %cst_8 = arith.constant 0.000000e+00 : f32
      %12 = vector.broadcast %cst_8 : f32 to vector<1x128xf32>
      %c0_9 = arith.constant 0 : index
      %c0_10 = arith.constant 0 : index
      %13 = vector.load %arg4[%c0_9, %c0_10] : memref<1x128xf32, #tpu.memory_space<vmem>>, vector<1x128xf32>
      tpu.vector_store %arg4[%c0_9, %c0_10], %12 {strides = array<i32>} : memref<1x128xf32, #tpu.memory_space<vmem>>, vector<1x128xf32>,
    } else {
    }
    %c0 = arith.constant 0 : index
    %c0_1 = arith.constant 0 : index
    %3 = vector.load %arg4[%c0, %c0_1] : memref<1x128xf32, #tpu.memory_space<vmem>>, vector<1x128xf32>
    %c0_2 = arith.constant 0 : index
    %c0_3 = arith.constant 0 : index
    %4 = vector.load %arg1[%c0_2, %c0_3] : memref<8x128xf32, #tpu.memory_space<vmem>>, vector<8x128xf32>
    %cst = arith.constant dense<0.000000e+00> : vector<128xf32>
    %5 = vector.multi_reduction <add>, %4, %cst [0] : vector<8x128xf32> to vector<128xf32>
    %6 = vector.shape_cast %5 : vector<128xf32> to vector<1x128xf32>
    %7 = arith.addf %3, %6 : vector<1x128xf32>
    %c0_4 = arith.constant 0 : index
    %c0_5 = arith.constant 0 : index
    %8 = vector.load %arg4[%c0_4, %c0_5] : memref<1x128xf32, #tpu.memory_space<vmem>>, vector<1x128xf32>
    tpu.vector_store %arg4[%c0_4, %c0_5], %7 {strides = array<i32>} : memref<1x128xf32, #tpu.memory_space<vmem>>, vector<1x128xf32>,
    %c0_i32_6 = arith.constant 0 : i32
    %9 = arith.cmpi eq, %arg0, %c0_i32_6 : i32
    %10 = arith.extui %9 : i1 to i32
    %c0_i32_7 = arith.constant 0 : i32
    %11 = arith.cmpi ne, %10, %c0_i32_7 : i32
    scf.if %11 {
      %c0_8 = arith.constant 0 : index
      %c0_9 = arith.constant 0 : index
      %12 = vector.load %arg4[%c0_8, %c0_9] : memref<1x128xf32, #tpu.memory_space<vmem>>, vector<1x128xf32>
      %cst_10 = arith.constant 1.250000e-01 : f32
      %13 = vector.broadcast %cst_10 : f32 to vector<1x128xf32>
      %14 = arith.mulf %12, %13 : vector<1x128xf32>
      %c0_11 = arith.constant 0 : index
      %c0_12 = arith.constant 0 : index
      %15 = vector.load %arg2[%c0_11, %c0_12] : memref<1x128xf32, #tpu.memory_space<vmem>>, vector<1x128xf32>
      %cst_13 = arith.constant 0.000000e+00 : f32
      %16 = vector.broadcast %cst_13 : f32 to vector<1x128xf32>
      %17 = arith.maximumf %15, %16 : vector<1x128xf32>
      %18 = arith.mulf %14, %17 : vector<1x128xf32>
      %cst_14 = arith.constant dense<0.000000e+00> : vector<1xf32>
      %19 = vector.multi_reduction <add>, %18, %cst_14 [1] : vector<1x128xf32> to vector<1xf32>
      %20 = vector.shape_cast %19 : vector<1xf32> to vector<1x1xf32>
      %21 = vector.broadcast %20 : vector<1x1xf32> to vector<1x128xf32>
      %22 = arith.divf %17, %21 : vector<1x128xf32>
      %c0_15 = arith.constant 0 : index
      %c0_16 = arith.constant 0 : index
      %23 = vector.load %arg3[%c0_15, %c0_16] : memref<1x128xf32, #tpu.memory_space<vmem>>, vector<1x128xf32>
      tpu.vector_store %arg3[%c0_15, %c0_16], %22 {strides = array<i32>} : memref<1x128xf32, #tpu.memory_space<vmem>>, vector<1x128xf32>,
    } else {
    }
    return
  }
  func.func @transform_0(%arg0: i32) -> (i32, i32) {
    %c0_i32 = arith.constant 0 : i32
    %c0_i32_0 = arith.constant 0 : i32
    return %arg0, %c0_i32 : i32, i32
  }
  func.func @transform_1(%arg0: i32) -> (i32, i32) {
    %c0_i32 = arith.constant 0 : i32
    %c0_i32_0 = arith.constant 0 : i32
    %c0_i32_1 = arith.constant 0 : i32
    return %c0_i32, %c0_i32_0 : i32, i32
  }
  func.func @transform_2(%arg0: i32) -> (i32, i32) {
    %c0_i32 = arith.constant 0 : i32
    %c0_i32_0 = arith.constant 0 : i32
    %c0_i32_1 = arith.constant 0 : i32
    return %c0_i32, %c0_i32_0 : i32, i32
  }
}

</mosaic_0001>

<llo_original>
// kernel: tpu_custom_call.1
$region0: #{tpu_custom_call.1}
  #allocation0 [shape = 'u32[]', space=smem, size = 0x4, offset = 0x4, fixed_abs, tag = 'smem constant byte address 0x4 - core index']
  #allocation1 [shape = 'u32[144,128]{1,0:T(1,128)}', space=vmem, size = 0x12000, scoped, tag = 'internal scratch']
  #allocation2 [shape = 'f32[1,128]{1,0:T(1,128)}', space=vmem, size = 0x200, scoped, tag = 'scratch operand']
  %s0 = inlined_call_operand.hbm [shape: f32[8,128], index: 0, kind: input, shape index: {}]
  %s1 = inlined_call_operand.vmem [shape: f32[1,128], index: 1, kind: input, shape index: {}]
  %s2 = inlined_call_operand.hbm [shape: f32[1,128], index: 2, kind: output, shape index: {}]
  %s3 = sld [smem:[#allocation0]]
  $region30: #{tpu_custom_call.1} parent=0
    _
  %s5 = ssub.s32 1, %s3
  %s6 = scalar_select 0, %s5, %s3
  $region1: #{tpu_custom_call.1} parent=0
    #allocation3 [shape = 'u8[4096]{0}', space=vmem, size = 0x1000, scoped, tag = 'input window, operand 0, single buffered']
    #allocation4 [shape = 's32[1]{0}', space=sflag, size = 0x4, scoped, tag = 'scoped memory for tpu_custom_call.1']
    #allocation5 [shape = 's32[1]{0}', space=sflag, size = 0x4, scoped, tag = 'scoped memory for tpu_custom_call.1']
    #allocation6 [shape = 'u8[512]{0}', space=vmem, size = 0x400, scoped, tag = 'output window, operand 0, single buffered']
    %7 = vsyncpa [#allocation4], 0
    %8 = vsyncpa [#allocation5], 0
    // Predicated region
    $region2: #{tpu_custom_call.1} parent=1 // pred_check
      _
    $region3: #{tpu_custom_call.1} parent=1 // pred_check_branch
      %10 = sbr.rel (0) target = $region5
    $region4: #{tpu_custom_call.1} parent=1 // pred_region
      %s12 = ssub.s32 128, 128
      %13 = vsyncadd [#allocation4], %s12
      %s15 = sshll.u32 [#allocation3], 4
      %s16 = int_to_ptr.vmem [resolvable:$true] %s15
      %18 = dma.hbm_to_vmem [thread:$0]  %s0, 128, %s16, [#allocation4]
    $region5: #{tpu_custom_call.1} parent=1 // pred_fallthru
      _
    // Predicated region
    $region6: #{tpu_custom_call.1} parent=1 // pred_check
      _
    $region7: #{tpu_custom_call.1} parent=1 // pred_check_branch
      %20 = sbr.rel (0) target = $region9
    $region8: #{tpu_custom_call.1} parent=1 // pred_region
      _
    $region9: #{tpu_custom_call.1} parent=1 // pred_fallthru
      _
    // Predicated region
    $region10: #{tpu_custom_call.1} parent=1 // pred_check
      _
    $region11: #{tpu_custom_call.1} parent=1 // pred_check_branch
      %22 = sbr.rel (0) target = $region13
    $region12: #{tpu_custom_call.1} parent=1 // pred_region
      %23 = dma.done [#allocation4], 128
    $region13: #{tpu_custom_call.1} parent=1 // pred_fallthru
      _
    %p24 = scmp.eq.s32.totalorder 0, 0
    // Predicated region
    $region14: #{tpu_custom_call.1} parent=1 // pred_check
      %p25 = pneg %p24
    $region15: #{tpu_custom_call.1} parent=1 // pred_check_branch
      %27 = sbr.rel (%p25) target = $region17
    $region16: #{tpu_custom_call.1} parent=1 // pred_region
      %28 = vst [vmem:[#allocation2] sm:$0x1] 0.0
    $region17: #{tpu_custom_call.1} parent=1 // pred_fallthru
      _
    %v29 = vld [vmem:[#allocation2] sm:$0x1]
    %v30 = vld [vmem:[#allocation3] sm:$0xff]
    %v31 = vrot.slane %v30, 4
    %v32 = vadd.f32 %v30, %v31
    %v33 = vrot.slane %v32, 2
    %v34 = vadd.f32 %v32, %v33
    %v35 = vrot.slane %v34, 1
    %v36 = vadd.f32 %v34, %v35
    %v37 = vadd.f32 %v29, %v36
    %38 = vst [vmem:[#allocation2] sm:$0x1] %v37
    // Predicated region
    $region18: #{tpu_custom_call.1} parent=1 // pred_check
      %p39 = pneg %p24
    $region19: #{tpu_custom_call.1} parent=1 // pred_check_branch
      %41 = sbr.rel (%p39) target = $region21
    $region20: #{tpu_custom_call.1} parent=1 // pred_region
      %v42 = vld [vmem:[#allocation2] sm:$0x1]
      %v43 = vmul.f32 %v42, 0.125
      %v44 = vld [vmem:[%s1] sm:$0x1]
      %v45 = vmax.f32 %v44, 0.0
      %v46 = vmul.f32 %v43, %v45
      %vm47 = vcmask 1040384
      %v48 = vsel %vm47, %v46, 0.0
      %49 = vadd.xlane.f32.xlu0 %v48
      %v50 = vpop.xlane.xlu0 %49
      %v51 = vrcp.pop %v50
      %v52 = vmul.f32 %v45, %v51
      %53 = vst [vmem:[#allocation6] sm:$0x1] %v52
    $region21: #{tpu_custom_call.1} parent=1 // pred_fallthru
      _
    // Predicated region
    $region22: #{tpu_custom_call.1} parent=1 // pred_check
      _
    $region23: #{tpu_custom_call.1} parent=1 // pred_check_branch
      %55 = sbr.rel (0) target = $region25
    $region24: #{tpu_custom_call.1} parent=1 // pred_region
      %s57 = ssub.s32 16, 16
      %58 = vsyncadd [#allocation5], %s57
      %s60 = sshll.u32 [#allocation6], 4
      %s61 = int_to_ptr.vmem [resolvable:$true] %s60
      %63 = dma.vmem_to_hbm [thread:$0]  %s61, 16, %s2, [#allocation5]
    $region25: #{tpu_custom_call.1} parent=1 // pred_fallthru
      _
    // Predicated region
    $region26: #{tpu_custom_call.1} parent=1 // pred_check
      _
    $region27: #{tpu_custom_call.1} parent=1 // pred_check_branch
      %65 = sbr.rel (0) target = $region29
    $region28: #{tpu_custom_call.1} parent=1 // pred_region
      %66 = dma.done [#allocation5], 16
    $region29: #{tpu_custom_call.1} parent=1 // pred_fallthru
      _
    %67 = vsyncpa [#allocation4], 1
    %68 = vsyncpa [#allocation5], 1

</llo_original>
